<compile_context>
chip_gen: v6e
topology: v6e:2x2x1
jax: 0.10.0
libtpu: 0.0.40
codegen_flags: <defaults>
</compile_context>

<pallas_src>
import math

import jax
import jax.numpy as jnp
from jax.experimental import pallas as pl
from jax.experimental.pallas import tpu as pltpu


def _round_up(n, m):
    return ((n + m - 1) // m) * m


def _pad2d(a, rows, cols):
    pr, pc = rows - a.shape[0], cols - a.shape[1]
    if pr == 0 and pc == 0:
        return a
    return jnp.pad(a, ((0, pr), (0, pc)))


def mlp_kernel(x_ref, w1_ref, b1_ref, w2_ref, b2_ref, w3_ref, b3_ref, o_ref):
    # Fused 3-layer MLP on one batch tile; bf16 operands on the MXU, f32 accumulation.
    x = x_ref[...]
    h1 = jnp.dot(x, w1_ref[...], preferred_element_type=jnp.float32) + b1_ref[...]
    h1 = jnp.maximum(h1, 0.0)                          # ReLU  (dropout -> identity, eval mode)

    h2 = jnp.dot(h1.astype(w2_ref.dtype), w2_ref[...],
                 preferred_element_type=jnp.float32) + b2_ref[...]
    h2 = jnp.maximum(h2, 0.0)                          # ReLU  (dropout -> identity)

    h3 = jnp.dot(h2.astype(w3_ref.dtype), w3_ref[...],
                 preferred_element_type=jnp.float32) + b3_ref[...]
    o_ref[...] = jnp.maximum(h3, 0.0).astype(o_ref.dtype)   # final ReLU (x8 = act(fcout(x6)))


def semantic_mlp_forward(x, params, *, compute_dtype=jnp.bfloat16):
    """x: [B, in_features] float32. params: weights pre-transposed to [in, out], biases [1, out]."""
    w1, b1, w2, b2, w3, b3 = (params["w1"], params["b1"], params["w2"],
                              params["b2"], params["w3"], params["b3"])
    B, IN = x.shape
    H = w1.shape[1]
    OUT = w3.shape[1]

    # Pad feature dims to lane multiples (128); pad batch to a sublane multiple.
    IN_p, H_p, OUT_p = (_round_up(d, 128) for d in (IN, H, OUT))
    if B <= 512:
        tile_m = _round_up(B, 8)        # single tile -> grid=(1,), whole batch through the MXU
        B_p = tile_m
    else:
        tile_m = 256                    # 256-row tiles fill v6e/v7x MXU; grid > 1 feeds both v7x TCs
        B_p = _round_up(B, tile_m)

    x_p = _pad2d(x, B_p, IN_p).astype(compute_dtype)
    w1_p = _pad2d(w1, IN_p, H_p).astype(compute_dtype)
    w2_p = _pad2d(w2, H_p, H_p).astype(compute_dtype)
    w3_p = _pad2d(w3, H_p, OUT_p).astype(compute_dtype)
    b1_p = _pad2d(b1.reshape(1, -1), 1, H_p).astype(jnp.float32)
    b2_p = _pad2d(b2.reshape(1, -1), 1, H_p).astype(jnp.float32)
    b3_p = _pad2d(b3.reshape(1, -1), 1, OUT_p).astype(jnp.float32)

    # Explicit VMEM budget: resident weights (x2 headroom for pipeline buffering),
    # double-buffered x/out tiles, f32 activation temporaries, plus slack.
    bpe = jnp.dtype(compute_dtype).itemsize
    weight_bytes = (IN_p * H_p + H_p * H_p + H_p * OUT_p) * bpe + (2 * H_p + OUT_p) * 4
    io_bytes = 2 * (tile_m * IN_p * bpe + tile_m * OUT_p * 4)
    act_bytes = tile_m * (2 * H_p + OUT_p) * 4
    vmem_limit = int(min(120 * 1024 * 1024,
                         max(32 * 1024 * 1024,
                             2 * weight_bytes + io_bytes + act_bytes + (4 << 20))))

    grid = (B_p // tile_m,)
    out_p = pl.pallas_call(
        mlp_kernel,
        out_shape=jax.ShapeDtypeStruct((B_p, OUT_p), jnp.float32),
        grid_spec=pltpu.PrefetchScalarGridSpec(
            num_scalar_prefetch=0,
            grid=grid,
            in_specs=[
                pl.BlockSpec((tile_m, IN_p), lambda i: (i, 0)),   # x tile
                pl.BlockSpec((IN_p, H_p),    lambda i: (0, 0)),   # W1 (resident)
                pl.BlockSpec((1, H_p),       lambda i: (0, 0)),   # b1
                pl.BlockSpec((H_p, H_p),     lambda i: (0, 0)),   # W2 (resident)
                pl.BlockSpec((1, H_p),       lambda i: (0, 0)),   # b2
                pl.BlockSpec((H_p, OUT_p),   lambda i: (0, 0)),   # W3 (resident)
                pl.BlockSpec((1, OUT_p),     lambda i: (0, 0)),   # b3
            ],
            out_specs=pl.BlockSpec((tile_m, OUT_p), lambda i: (i, 0)),
        ),
        compiler_params=pltpu.CompilerParams(
            dimension_semantics=("parallel",),
            vmem_limit_bytes=vmem_limit,
        ),
    )(x_p, w1_p, b1_p, w2_p, b2_p, w3_p, b3_p)

    return out_p[:B, :OUT]


def init_params(key, in_features, hidden_features, out_features, dtype=jnp.float32):
    """Deterministic init. PyTorch nn.Linear stores W as [out, in]; we store W.T ([in, out])."""
    ks = jax.random.split(key, 6)

    def linear(kw, kb, fan_in, fan_out):
        bound = 1.0 / math.sqrt(fan_in)
        w = jax.random.uniform(kw, (fan_in, fan_out), dtype, -bound, bound)  # already W.T
        b = jax.random.uniform(kb, (1, fan_out), dtype, -bound, bound)
        return w, b

    w1, b1 = linear(ks[0], ks[1], in_features, hidden_features)
    w2, b2 = linear(ks[2], ks[3], hidden_features, hidden_features)
    w3, b3 = linear(ks[4], ks[5], hidden_features, out_features)
    return dict(w1=w1, b1=b1, w2=w2, b2=b2, w3=w3, b3=b3)


def reference_forward(x, p):
    h = jnp.maximum(x @ p["w1"] + p["b1"], 0.0)
    h = jnp.maximum(h @ p["w2"] + p["b2"], 0.0)
    return jnp.maximum(h @ p["w3"] + p["b3"], 0.0)   # final ReLU per Semantic_Mlp.forward


if __name__ == "__main__":
    # Small shapes consistent with the module (Linear chain); IN/OUT deliberately not 128-aligned
    # (scaled-down analogue of in_features=600) to exercise the padding path.
    B, IN, HID, OUT = 16, 120, 256, 192

    key = jax.random.PRNGKey(0)
    kx, kp = jax.random.split(key)
    x = jax.random.normal(kx, (B, IN), jnp.float32)
    params = init_params(kp, IN, HID, OUT)

    out = semantic_mlp_forward(x, params)
    out = jax.block_until_ready(out)

    ref = reference_forward(x, params)
    assert out.shape == (B, OUT)
    # bf16 operands with f32 accumulation: relaxed tolerance vs f32 reference.
    assert jnp.allclose(out, ref, atol=5e-2, rtol=5e-2), "mismatch vs reference"

    print("KERNEL_OK")
</pallas_src>

<mosaic_0001>
module attributes {stable_mosaic.version = 11 : i64} {
  func.func @mlp_kernel(%arg0: i32, %arg1: memref<16x128xbf16, #tpu.memory_space<vmem>>, %arg2: memref<128x256xbf16, #tpu.memory_space<vmem>>, %arg3: memref<1x256xf32, #tpu.memory_space<vmem>>, %arg4: memref<256x256xbf16, #tpu.memory_space<vmem>>, %arg5: memref<1x256xf32, #tpu.memory_space<vmem>>, %arg6: memref<256x256xbf16, #tpu.memory_space<vmem>>, %arg7: memref<1x256xf32, #tpu.memory_space<vmem>>, %arg8: memref<16x256xf32, #tpu.memory_space<vmem>>) attributes {dimension_semantics = [#tpu.dimension_semantics<parallel>], iteration_bounds = array<i64: 1>, scalar_prefetch = 0 : i64, scratch_operands = 0 : i64, tpu.core_type = #tpu.core_type<tc>, window_params = [{transform_indices = @transform_0, window_bounds = array<i64: 16, 128>}, {pipeline_mode = #tpu.pipeline_mode<synchronous>, transform_indices = @transform_1, window_bounds = array<i64: 128, 256>}, {pipeline_mode = #tpu.pipeline_mode<synchronous>, transform_indices = @transform_2, window_bounds = array<i64: 1, 256>}, {pipeline_mode = #tpu.pipeline_mode<synchronous>, transform_indices = @transform_3, window_bounds = array<i64: 256, 256>}, {pipeline_mode = #tpu.pipeline_mode<synchronous>, transform_indices = @transform_4, window_bounds = array<i64: 1, 256>}, {pipeline_mode = #tpu.pipeline_mode<synchronous>, transform_indices = @transform_5, window_bounds = array<i64: 256, 256>}, {pipeline_mode = #tpu.pipeline_mode<synchronous>, transform_indices = @transform_6, window_bounds = array<i64: 1, 256>}, {transform_indices = @transform_7, window_bounds = array<i64: 16, 256>}]} {
    %c0 = arith.constant 0 : index
    %c0_0 = arith.constant 0 : index
    %0 = vector.load %arg1[%c0, %c0_0] : memref<16x128xbf16, #tpu.memory_space<vmem>>, vector<16x128xbf16>
    %c0_1 = arith.constant 0 : index
    %c0_2 = arith.constant 0 : index
    %1 = vector.load %arg2[%c0_1, %c0_2] : memref<128x256xbf16, #tpu.memory_space<vmem>>, vector<128x256xbf16>
    %cst = arith.constant dense<0.000000e+00> : vector<16x256xf32>
    %2 = tpu.matmul %0, %1, %cst {dimension_numbers = #tpu.dot_dimension_numbers<[1], [0], [0], [1], [0, 0, 1, 1], [], []>} : vector<16x128xbf16>, vector<128x256xbf16>, vector<16x256xf32> -> vector<16x256xf32>
    %c0_3 = arith.constant 0 : index
    %c0_4 = arith.constant 0 : index
    %3 = vector.load %arg3[%c0_3, %c0_4] : memref<1x256xf32, #tpu.memory_space<vmem>>, vector<1x256xf32>
    %4 = vector.broadcast %3 : vector<1x256xf32> to vector<16x256xf32>
    %5 = arith.addf %2, %4 : vector<16x256xf32>
    %cst_5 = arith.constant 0.000000e+00 : f32
    %6 = vector.broadcast %cst_5 : f32 to vector<16x256xf32>
    %7 = arith.maximumf %5, %6 : vector<16x256xf32>
    %8 = arith.truncf %7 : vector<16x256xf32> to vector<16x256xbf16>
    %c0_6 = arith.constant 0 : index
    %c0_7 = arith.constant 0 : index
    %9 = vector.load %arg4[%c0_6, %c0_7] : memref<256x256xbf16, #tpu.memory_space<vmem>>, vector<256x256xbf16>
    %cst_8 = arith.constant dense<0.000000e+00> : vector<16x256xf32>
    %10 = tpu.matmul %8, %9, %cst_8 {dimension_numbers = #tpu.dot_dimension_numbers<[1], [0], [0], [1], [0, 0, 1, 1], [], []>} : vector<16x256xbf16>, vector<256x256xbf16>, vector<16x256xf32> -> vector<16x256xf32>
    %c0_9 = arith.constant 0 : index
    %c0_10 = arith.constant 0 : index
    %11 = vector.load %arg5[%c0_9, %c0_10] : memref<1x256xf32, #tpu.memory_space<vmem>>, vector<1x256xf32>
    %12 = vector.broadcast %11 : vector<1x256xf32> to vector<16x256xf32>
    %13 = arith.addf %10, %12 : vector<16x256xf32>
    %cst_11 = arith.constant 0.000000e+00 : f32
    %14 = vector.broadcast %cst_11 : f32 to vector<16x256xf32>
    %15 = arith.maximumf %13, %14 : vector<16x256xf32>
    %16 = arith.truncf %15 : vector<16x256xf32> to vector<16x256xbf16>
    %c0_12 = arith.constant 0 : index
    %c0_13 = arith.constant 0 : index
    %17 = vector.load %arg6[%c0_12, %c0_13] : memref<256x256xbf16, #tpu.memory_space<vmem>>, vector<256x256xbf16>
    %cst_14 = arith.constant dense<0.000000e+00> : vector<16x256xf32>
    %18 = tpu.matmul %16, %17, %cst_14 {dimension_numbers = #tpu.dot_dimension_numbers<[1], [0], [0], [1], [0, 0, 1, 1], [], []>} : vector<16x256xbf16>, vector<256x256xbf16>, vector<16x256xf32> -> vector<16x256xf32>
    %c0_15 = arith.constant 0 : index
    %c0_16 = arith.constant 0 : index
    %19 = vector.load %arg7[%c0_15, %c0_16] : memref<1x256xf32, #tpu.memory_space<vmem>>, vector<1x256xf32>
    %20 = vector.broadcast %19 : vector<1x256xf32> to vector<16x256xf32>
    %21 = arith.addf %18, %20 : vector<16x256xf32>
    %cst_17 = arith.constant 0.000000e+00 : f32
    %22 = vector.broadcast %cst_17 : f32 to vector<16x256xf32>
    %23 = arith.maximumf %21, %22 : vector<16x256xf32>
    %c0_18 = arith.constant 0 : index
    %c0_19 = arith.constant 0 : index
    %24 = vector.load %arg8[%c0_18, %c0_19] : memref<16x256xf32, #tpu.memory_space<vmem>>, vector<16x256xf32>
    tpu.vector_store %arg8[%c0_18, %c0_19], %23 {strides = array<i32>} : memref<16x256xf32, #tpu.memory_space<vmem>>, vector<16x256xf32>,
    return
  }
  func.func @transform_0(%arg0: i32) -> (i32, i32) {
    %c0_i32 = arith.constant 0 : i32
    %c0_i32_0 = arith.constant 0 : i32
    return %arg0, %c0_i32 : i32, i32
  }
  func.func @transform_1(%arg0: i32) -> (i32, i32) {
    %c0_i32 = arith.constant 0 : i32
    %c0_i32_0 = arith.constant 0 : i32
    %c0_i32_1 = arith.constant 0 : i32
    return %c0_i32, %c0_i32_0 : i32, i32
  }
  func.func @transform_2(%arg0: i32) -> (i32, i32) {
    %c0_i32 = arith.constant 0 : i32
    %c0_i32_0 = arith.constant 0 : i32
    %c0_i32_1 = arith.constant 0 : i32
    return %c0_i32, %c0_i32_0 : i32, i32
  }
  func.func @transform_3(%arg0: i32) -> (i32, i32) {
    %c0_i32 = arith.constant 0 : i32
    %c0_i32_0 = arith.constant 0 : i32
    %c0_i32_1 = arith.constant 0 : i32
    return %c0_i32, %c0_i32_0 : i32, i32
  }
  func.func @transform_4(%arg0: i32) -> (i32, i32) {
    %c0_i32 = arith.constant 0 : i32
    %c0_i32_0 = arith.constant 0 : i32
    %c0_i32_1 = arith.constant 0 : i32
    return %c0_i32, %c0_i32_0 : i32, i32
  }
  func.func @transform_5(%arg0: i32) -> (i32, i32) {
    %c0_i32 = arith.constant 0 : i32
    %c0_i32_0 = arith.constant 0 : i32
    %c0_i32_1 = arith.constant 0 : i32
    return %c0_i32, %c0_i32_0 : i32, i32
  }
  func.func @transform_6(%arg0: i32) -> (i32, i32) {
    %c0_i32 = arith.constant 0 : i32
    %c0_i32_0 = arith.constant 0 : i32
    %c0_i32_1 = arith.constant 0 : i32
    return %c0_i32, %c0_i32_0 : i32, i32
  }
  func.func @transform_7(%arg0: i32) -> (i32, i32) {
    %c0_i32 = arith.constant 0 : i32
    %c0_i32_0 = arith.constant 0 : i32
    return %arg0, %c0_i32 : i32, i32
  }
}

</mosaic_0001>

<llo_original>
// kernel: tpu_custom_call.1
$region0: #{tpu_custom_call.1}
  #allocation0 [shape = 'u32[]', space=smem, size = 0x4, offset = 0x4, fixed_abs, tag = 'smem constant byte address 0x4 - core index']
  #allocation1 [shape = 'u32[144,128]{1,0:T(1,128)}', space=vmem, size = 0x12000, scoped, tag = 'internal scratch']
  %s0 = inlined_call_operand.hbm [shape: bf16[16,128], index: 0, kind: input, shape index: {}]
  %s1 = inlined_call_operand.hbm [shape: bf16[128,256], index: 1, kind: input, shape index: {}]
  %s2 = inlined_call_operand.vmem [shape: f32[1,256], index: 2, kind: input, shape index: {}]
  %s3 = inlined_call_operand.hbm [shape: bf16[256,256], index: 3, kind: input, shape index: {}]
  %s4 = inlined_call_operand.vmem [shape: f32[1,256], index: 4, kind: input, shape index: {}]
  %s5 = inlined_call_operand.hbm [shape: bf16[256,256], index: 5, kind: input, shape index: {}]
  %s6 = inlined_call_operand.vmem [shape: f32[1,256], index: 6, kind: input, shape index: {}]
  %s7 = inlined_call_operand.hbm [shape: f32[16,256], index: 7, kind: output, shape index: {}]
  %s8 = sld [smem:[#allocation0]]
  $region54: #{tpu_custom_call.1} parent=0
    _
  %s10 = ssub.s32 1, %s8
  %s11 = scalar_select 0, %s10, %s8
  $region1: #{tpu_custom_call.1} parent=0
    #allocation2 [shape = 'u8[4096]{0}', space=vmem, size = 0x1000, scoped, tag = 'input window, operand 0, single buffered']
    #allocation3 [shape = 's32[1]{0}', space=sflag, size = 0x4, scoped, tag = 'scoped memory for tpu_custom_call.1']
    #allocation4 [shape = 's32[1]{0}', space=sflag, size = 0x4, scoped, tag = 'scoped memory for tpu_custom_call.1']
    #allocation5 [shape = 'u8[65536]{0}', space=vmem, size = 0x10000, scoped, tag = 'input window, operand 1, single buffered']
    #allocation6 [shape = 's32[1]{0}', space=sflag, size = 0x4, scoped, tag = 'scoped memory for tpu_custom_call.1']
    #allocation7 [shape = 'u8[131072]{0}', space=vmem, size = 0x20000, scoped, tag = 'input window, operand 3, single buffered']
    #allocation8 [shape = 'u8[131072]{0}', space=vmem, size = 0x20000, scoped, tag = 'input window, operand 5, single buffered']
    #allocation9 [shape = 's32[1]{0}', space=sflag, size = 0x4, scoped, tag = 'scoped memory for tpu_custom_call.1']
    #allocation10 [shape = 'u8[16384]{0}', space=vmem, size = 0x4000, scoped, tag = 'output window, operand 0, single buffered']
    %12 = vsyncpa [#allocation3], 0
    %13 = vsyncpa [#allocation6], 0
    %14 = vsyncpa [#allocation9], 0
    %15 = vsyncpa [#allocation4], 0
    // Predicated region
    $region2: #{tpu_custom_call.1} parent=1 // pred_check
      _
    $region3: #{tpu_custom_call.1} parent=1 // pred_check_branch
      %17 = sbr.rel (0) target = $region5
    $region4: #{tpu_custom_call.1} parent=1 // pred_region
      %s19 = ssub.s32 128, 128
      %20 = vsyncadd [#allocation3], %s19
      %s21 = sshll.u32 [#allocation2], 4
      %s22 = int_to_ptr.vmem [resolvable:$true] %s21
      %27 = dma.hbm_to_vmem [thread:$0]  %s0, 128, %s22, [#allocation3], 64, 64, 4
    $region5: #{tpu_custom_call.1} parent=1 // pred_fallthru
      _
    // Predicated region
    $region6: #{tpu_custom_call.1} parent=1 // pred_check
      _
    $region7: #{tpu_custom_call.1} parent=1 // pred_check_branch
      %29 = sbr.rel (0) target = $region9
    $region8: #{tpu_custom_call.1} parent=1 // pred_region
      %s31 = ssub.s32 2048, 2048
      %32 = vsyncadd [#allocation6], %s31
      %s33 = sshll.u32 [#allocation5], 4
      %s34 = int_to_ptr.vmem [resolvable:$true] %s33
      %39 = dma.hbm_to_vmem [thread:$0]  %s1, 2048, %s34, [#allocation6], 128, 128, 8
    $region9: #{tpu_custom_call.1} parent=1 // pred_fallthru
      _
    // Predicated region
    $region10: #{tpu_custom_call.1} parent=1 // pred_check
      _
    $region11: #{tpu_custom_call.1} parent=1 // pred_check_branch
      %41 = sbr.rel (0) target = $region13
    $region12: #{tpu_custom_call.1} parent=1 // pred_region
      _
    $region13: #{tpu_custom_call.1} parent=1 // pred_fallthru
      _
    // Predicated region
    $region14: #{tpu_custom_call.1} parent=1 // pred_check
      _
    $region15: #{tpu_custom_call.1} parent=1 // pred_check_branch
      %43 = sbr.rel (0) target = $region17
    $region16: #{tpu_custom_call.1} parent=1 // pred_region
      %s45 = ssub.s32 4096, 4096
      %46 = vsyncadd [#allocation6], %s45
      %s47 = sshll.u32 [#allocation7], 4
      %s48 = int_to_ptr.vmem [resolvable:$true] %s47
      %53 = dma.hbm_to_vmem [thread:$0]  %s3, 4096, %s48, [#allocation6], 128, 128, 8
    $region17: #{tpu_custom_call.1} parent=1 // pred_fallthru
      _
    // Predicated region
    $region18: #{tpu_custom_call.1} parent=1 // pred_check
      _
    $region19: #{tpu_custom_call.1} parent=1 // pred_check_branch
      %55 = sbr.rel (0) target = $region21
    $region20: #{tpu_custom_call.1} parent=1 // pred_region
      _
    $region21: #{tpu_custom_call.1} parent=1 // pred_fallthru
      _
    // Predicated region
    $region22: #{tpu_custom_call.1} parent=1 // pred_check
      _
    $region23: #{tpu_custom_call.1} parent=1 // pred_check_branch
      %57 = sbr.rel (0) target = $region25
    $region24: #{tpu_custom_call.1} parent=1 // pred_region
      %s59 = ssub.s32 4096, 4096
      %60 = vsyncadd [#allocation9], %s59
      %s61 = sshll.u32 [#allocation8], 4
      %s62 = int_to_ptr.vmem [resolvable:$true] %s61
      %67 = dma.hbm_to_vmem [thread:$0]  %s5, 4096, %s62, [#allocation9], 128, 128, 8
    $region25: #{tpu_custom_call.1} parent=1 // pred_fallthru
      _
    // Predicated region
    $region26: #{tpu_custom_call.1} parent=1 // pred_check
      _
    $region27: #{tpu_custom_call.1} parent=1 // pred_check_branch
      %69 = sbr.rel (0) target = $region29
    $region28: #{tpu_custom_call.1} parent=1 // pred_region
      _
    $region29: #{tpu_custom_call.1} parent=1 // pred_fallthru
      _
    // Predicated region
    $region30: #{tpu_custom_call.1} parent=1 // pred_check
      _
    $region31: #{tpu_custom_call.1} parent=1 // pred_check_branch
      %71 = sbr.rel (0) target = $region33
    $region32: #{tpu_custom_call.1} parent=1 // pred_region
      %72 = dma.done [#allocation3], 128
    $region33: #{tpu_custom_call.1} parent=1 // pred_fallthru
      _
    // Predicated region
    $region34: #{tpu_custom_call.1} parent=1 // pred_check
      _
    $region35: #{tpu_custom_call.1} parent=1 // pred_check_branch
      %74 = sbr.rel (0) target = $region37
    $region36: #{tpu_custom_call.1} parent=1 // pred_region
      %75 = dma.done [#allocation6], 2048
    $region37: #{tpu_custom_call.1} parent=1 // pred_fallthru
      _
    // Predicated region
    $region38: #{tpu_custom_call.1} parent=1 // pred_check
      _
    $region39: #{tpu_custom_call.1} parent=1 // pred_check_branch
      %77 = sbr.rel (0) target = $region41
    $region40: #{tpu_custom_call.1} parent=1 // pred_region
      %78 = dma.done [#allocation6], 4096
    $region41: #{tpu_custom_call.1} parent=1 // pred_fallthru
      _
    // Predicated region
    $region42: #{tpu_custom_call.1} parent=1 // pred_check
      _
    $region43: #{tpu_custom_call.1} parent=1 // pred_check_branch
      %80 = sbr.rel (0) target = $region45
    $region44: #{tpu_custom_call.1} parent=1 // pred_region
      %81 = dma.done [#allocation9], 4096
    $region45: #{tpu_custom_call.1} parent=1 // pred_fallthru
      _
    %v83 = vld [vmem:[#allocation2] sm:$0xf]
    %v84 = vld [vmem:[#allocation2 + $0x4] sm:$0xf]
    %v85 = vld [vmem:[#allocation5] sm:$0xff]
    %v86 = vld [vmem:[#allocation5 + $0x8] sm:$0xff]
    %v87 = vld [vmem:[#allocation5 + $0x10] sm:$0xff]
    %v88 = vld [vmem:[#allocation5 + $0x18] sm:$0xff]
    %v89 = vld [vmem:[#allocation5 + $0x20] sm:$0xff]
    %v90 = vld [vmem:[#allocation5 + $0x28] sm:$0xff]
    %v91 = vld [vmem:[#allocation5 + $0x30] sm:$0xff]
    %v92 = vld [vmem:[#allocation5 + $0x38] sm:$0xff]
    %v93 = vld [vmem:[#allocation5 + $0x40] sm:$0xff]
    %v94 = vld [vmem:[#allocation5 + $0x48] sm:$0xff]
    %v95 = vld [vmem:[#allocation5 + $0x50] sm:$0xff]
    %v96 = vld [vmem:[#allocation5 + $0x58] sm:$0xff]
    %v97 = vld [vmem:[#allocation5 + $0x60] sm:$0xff]
    %v98 = vld [vmem:[#allocation5 + $0x68] sm:$0xff]
    %v99 = vld [vmem:[#allocation5 + $0x70] sm:$0xff]
    %v100 = vld [vmem:[#allocation5 + $0x78] sm:$0xff]
    %v101 = vld [vmem:[%s2] sm:$0x3]
    %v103 = vlaneseq
    %v104 = vshrl.u32 %v103, 7
    %v105 = vsub.s32 0, %v104
    %v106 = vrot.slane %v101, %v105
    %v107 = vlaneseq
    %v108 = vshrl.u32 %v107, 7
    %v109 = vsub.s32 1, %v108
    %v110 = vrot.slane %v101, %v109
    %v115 = vunpack.c.l.b16 %v83
    %v116 = vunpack.c.l.b16 %v84
    %v117 = vpack.c.b16 %v116, %v115
    %v135 = vunpack.c.l.b16 %v85
    %v136 = vunpack.c.h.b16 %v85
    %v137 = vunpack.c.l.b16 %v86
    %v138 = vunpack.c.h.b16 %v86
    %v139 = vunpack.c.l.b16 %v87
    %v140 = vunpack.c.h.b16 %v87
    %v141 = vunpack.c.l.b16 %v88
    %v142 = vunpack.c.h.b16 %v88
    %v143 = vunpack.c.l.b16 %v89
    %v144 = vunpack.c.h.b16 %v89
    %v145 = vunpack.c.l.b16 %v90
    %v146 = vunpack.c.h.b16 %v90
    %v147 = vunpack.c.l.b16 %v91
    %v148 = vunpack.c.h.b16 %v91
    %v149 = vunpack.c.l.b16 %v92
    %v150 = vunpack.c.h.b16 %v92
    %v151 = vunpack.c.l.b16 %v93
    %v152 = vunpack.c.h.b16 %v93
    %v153 = vunpack.c.l.b16 %v94
    %v154 = vunpack.c.h.b16 %v94
    %v155 = vunpack.c.l.b16 %v95
    %v156 = vunpack.c.h.b16 %v95
    %v157 = vunpack.c.l.b16 %v96
    %v158 = vunpack.c.h.b16 %v96
    %v159 = vunpack.c.l.b16 %v97
    %v160 = vunpack.c.h.b16 %v97
    %v161 = vunpack.c.l.b16 %v98
    %v162 = vunpack.c.h.b16 %v98
    %v163 = vunpack.c.l.b16 %v99
    %v164 = vunpack.c.h.b16 %v99
    %v165 = vunpack.c.l.b16 %v100
    %v166 = vunpack.c.h.b16 %v100
    %v167 = vpack.c.b16 %v137, %v135
    %v168 = vpack.c.b16 %v138, %v136
    %v169 = vpack.c.b16 %v141, %v139
    %v170 = vpack.c.b16 %v142, %v140
    %v171 = vpack.c.b16 %v145, %v143
    %v172 = vpack.c.b16 %v146, %v144
    %v173 = vpack.c.b16 %v149, %v147
    %v174 = vpack.c.b16 %v150, %v148
    %v175 = vpack.c.b16 %v153, %v151
    %v176 = vpack.c.b16 %v154, %v152
    %v177 = vpack.c.b16 %v157, %v155
    %v178 = vpack.c.b16 %v158, %v156
    %v179 = vpack.c.b16 %v161, %v159
    %v180 = vpack.c.b16 %v162, %v160
    %v181 = vpack.c.b16 %v165, %v163
    %v182 = vpack.c.b16 %v166, %v164
    %199 = vmatprep.subr.bf16.mxu0 %v182
    %200 = vmatpush1.bf16.msra.mxu0 %v181
    %201 = vmatprep.subr.bf16.mxu0 %v180
    %202 = vmatpush1.bf16.msra.mxu0 %v179
    %203 = vmatprep.subr.bf16.mxu0 %v178
    %204 = vmatpush1.bf16.msra.mxu0 %v177
    %205 = vmatprep.subr.bf16.mxu0 %v176
    %206 = vmatpush1.bf16.msra.mxu0 %v175
    %207 = vmatprep.subr.bf16.mxu0 %v174
    %208 = vmatpush1.bf16.msra.mxu0 %v173
    %209 = vmatprep.subr.bf16.mxu0 %v172
    %210 = vmatpush1.bf16.msra.mxu0 %v171
    %211 = vmatprep.subr.bf16.mxu0 %v170
    %212 = vmatpush1.bf16.msra.mxu0 %v169
    %213 = vmatprep.subr.bf16.mxu0 %v168
    %214 = vmatpush1.bf16.msra.mxu0 %v167
    %215 = vmatprep.subr.bf16.mxu0 0
    %216 = vmatpush2.bf16.msra.mxu0 0
    %217 = vmatprep.subr.bf16.mxu0 0
    %218 = vmatpush2.bf16.msra.mxu0 0
    %219 = vmatprep.subr.bf16.mxu0 0
    %220 = vmatpush2.bf16.msra.mxu0 0
    %221 = vmatprep.subr.bf16.mxu0 0
    %222 = vmatpush2.bf16.msra.mxu0 0
    %223 = vmatprep.subr.bf16.mxu0 0
    %224 = vmatpush2.bf16.msra.mxu0 0
    %225 = vmatprep.subr.bf16.mxu0 0
    %226 = vmatpush2.bf16.msra.mxu0 0
    %227 = vmatprep.subr.bf16.mxu0 0
    %228 = vmatpush2.bf16.msra.mxu0 0
    %229 = vmatprep.subr.bf16.mxu0 0
    %230 = vmatpush2.bf16.msra.mxu0 0
    %231 = vmatprep.mubr.bf16.mxu0 0
    %232 = vmatmul.mubr.bf16.gmra.mxu0 %v117
    %v233 = vpop.f32.mrf.mxu0
    %v234 = vadd.f32 %v106, %v233
    %v235 = vpop.f32.mrf.mxu0
    %v236 = vadd.f32 %v110, %v235
    %v237 = vpop.f32.mrf.mxu0
    %v238 = vadd.f32 %v106, %v237
    %v239 = vpop.f32.mrf.mxu0
    %v240 = vadd.f32 %v110, %v239
    %241 = vdwg.mxu0
    %v242 = vmax.f32 %v234, 0.0
    %v243 = vmax.f32 %v236, 0.0
    %v244 = vmax.f32 %v238, 0.0
    %v245 = vmax.f32 %v240, 0.0
    %v246 = vpack.c.bf16 %v244, %v242
    %v247 = vpack.c.bf16 %v245, %v243
    %v248 = vld [vmem:[#allocation7] sm:$0xff]
    %v249 = vld [vmem:[#allocation7 + $0x8] sm:$0xff]
    %v250 = vld [vmem:[#allocation7 + $0x10] sm:$0xff]
    %v251 = vld [vmem:[#allocation7 + $0x18] sm:$0xff]
    %v252 = vld [vmem:[#allocation7 + $0x20] sm:$0xff]
    %v253 = vld [vmem:[#allocation7 + $0x28] sm:$0xff]
    %v254 = vld [vmem:[#allocation7 + $0x30] sm:$0xff]
    %v255 = vld [vmem:[#allocation7 + $0x38] sm:$0xff]
    %v256 = vld [vmem:[#allocation7 + $0x40] sm:$0xff]
    %v257 = vld [vmem:[#allocation7 + $0x48] sm:$0xff]
    %v258 = vld [vmem:[#allocation7 + $0x50] sm:$0xff]
    %v259 = vld [vmem:[#allocation7 + $0x58] sm:$0xff]
    %v260 = vld [vmem:[#allocation7 + $0x60] sm:$0xff]
    %v261 = vld [vmem:[#allocation7 + $0x68] sm:$0xff]
    %v262 = vld [vmem:[#allocation7 + $0x70] sm:$0xff]
    %v263 = vld [vmem:[#allocation7 + $0x78] sm:$0xff]
    %v264 = vld [vmem:[#allocation7 + $0x80] sm:$0xff]
    %v265 = vld [vmem:[#allocation7 + $0x88] sm:$0xff]
    %v266 = vld [vmem:[#allocation7 + $0x90] sm:$0xff]
    %v267 = vld [vmem:[#allocation7 + $0x98] sm:$0xff]
    %v268 = vld [vmem:[#allocation7 + $0xa0] sm:$0xff]
    %v269 = vld [vmem:[#allocation7 + $0xa8] sm:$0xff]
    %v270 = vld [vmem:[#allocation7 + $0xb0] sm:$0xff]
    %v271 = vld [vmem:[#allocation7 + $0xb8] sm:$0xff]
    %v272 = vld [vmem:[#allocation7 + $0xc0] sm:$0xff]
    %v273 = vld [vmem:[#allocation7 + $0xc8] sm:$0xff]
    %v274 = vld [vmem:[#allocation7 + $0xd0] sm:$0xff]
    %v275 = vld [vmem:[#allocation7 + $0xd8] sm:$0xff]
    %v276 = vld [vmem:[#allocation7 + $0xe0] sm:$0xff]
    %v277 = vld [vmem:[#allocation7 + $0xe8] sm:$0xff]
    %v278 = vld [vmem:[#allocation7 + $0xf0] sm:$0xff]
    %v279 = vld [vmem:[#allocation7 + $0xf8] sm:$0xff]
    %v280 = vld [vmem:[%s4] sm:$0x3]
    %v282 = vlaneseq
    %v283 = vshrl.u32 %v282, 7
    %v284 = vsub.s32 0, %v283
    %v285 = vrot.slane %v280, %v284
    %v286 = vlaneseq
    %v287 = vshrl.u32 %v286, 7
    %v288 = vsub.s32 1, %v287
    %v289 = vrot.slane %v280, %v288
    %v324 = vunpack.c.l.b16 %v248
    %v325 = vunpack.c.h.b16 %v248
    %v326 = vunpack.c.l.b16 %v249
    %v327 = vunpack.c.h.b16 %v249
    %v328 = vunpack.c.l.b16 %v250
    %v329 = vunpack.c.h.b16 %v250
    %v330 = vunpack.c.l.b16 %v251
    %v331 = vunpack.c.h.b16 %v251
    %v332 = vunpack.c.l.b16 %v252
    %v333 = vunpack.c.h.b16 %v252
    %v334 = vunpack.c.l.b16 %v253
    %v335 = vunpack.c.h.b16 %v253
    %v336 = vunpack.c.l.b16 %v254
    %v337 = vunpack.c.h.b16 %v254
    %v338 = vunpack.c.l.b16 %v255
    %v339 = vunpack.c.h.b16 %v255
    %v340 = vunpack.c.l.b16 %v256
    %v341 = vunpack.c.h.b16 %v256
    %v342 = vunpack.c.l.b16 %v257
    %v343 = vunpack.c.h.b16 %v257
    %v344 = vunpack.c.l.b16 %v258
    %v345 = vunpack.c.h.b16 %v258
    %v346 = vunpack.c.l.b16 %v259
    %v347 = vunpack.c.h.b16 %v259
    %v348 = vunpack.c.l.b16 %v260
    %v349 = vunpack.c.h.b16 %v260
    %v350 = vunpack.c.l.b16 %v261
    %v351 = vunpack.c.h.b16 %v261
    %v352 = vunpack.c.l.b16 %v262
    %v353 = vunpack.c.h.b16 %v262
    %v354 = vunpack.c.l.b16 %v263
    %v355 = vunpack.c.h.b16 %v263
    %v356 = vunpack.c.l.b16 %v264
    %v357 = vunpack.c.h.b16 %v264
    %v358 = vunpack.c.l.b16 %v265
    %v359 = vunpack.c.h.b16 %v265
    %v360 = vunpack.c.l.b16 %v266
    %v361 = vunpack.c.h.b16 %v266
    %v362 = vunpack.c.l.b16 %v267
    %v363 = vunpack.c.h.b16 %v267
    %v364 = vunpack.c.l.b16 %v268
    %v365 = vunpack.c.h.b16 %v268
    %v366 = vunpack.c.l.b16 %v269
    %v367 = vunpack.c.h.b16 %v269
    %v368 = vunpack.c.l.b16 %v270
    %v369 = vunpack.c.h.b16 %v270
    %v370 = vunpack.c.l.b16 %v271
    %v371 = vunpack.c.h.b16 %v271
    %v372 = vunpack.c.l.b16 %v272
    %v373 = vunpack.c.h.b16 %v272
    %v374 = vunpack.c.l.b16 %v273
    %v375 = vunpack.c.h.b16 %v273
    %v376 = vunpack.c.l.b16 %v274
    %v377 = vunpack.c.h.b16 %v274
    %v378 = vunpack.c.l.b16 %v275
    %v379 = vunpack.c.h.b16 %v275
    %v380 = vunpack.c.l.b16 %v276
    %v381 = vunpack.c.h.b16 %v276
    %v382 = vunpack.c.l.b16 %v277
    %v383 = vunpack.c.h.b16 %v277
    %v384 = vunpack.c.l.b16 %v278
    %v385 = vunpack.c.h.b16 %v278
    %v386 = vunpack.c.l.b16 %v279
    %v387 = vunpack.c.h.b16 %v279
    %v388 = vpack.c.b16 %v326, %v324
    %v389 = vpack.c.b16 %v327, %v325
    %v390 = vpack.c.b16 %v330, %v328
    %v391 = vpack.c.b16 %v331, %v329
    %v392 = vpack.c.b16 %v334, %v332
    %v393 = vpack.c.b16 %v335, %v333
    %v394 = vpack.c.b16 %v338, %v336
    %v395 = vpack.c.b16 %v339, %v337
    %v396 = vpack.c.b16 %v342, %v340
    %v397 = vpack.c.b16 %v343, %v341
    %v398 = vpack.c.b16 %v346, %v344
    %v399 = vpack.c.b16 %v347, %v345
    %v400 = vpack.c.b16 %v350, %v348
    %v401 = vpack.c.b16 %v351, %v349
    %v402 = vpack.c.b16 %v354, %v352
    %v403 = vpack.c.b16 %v355, %v353
    %v404 = vpack.c.b16 %v358, %v356
    %v405 = vpack.c.b16 %v359, %v357
    %v406 = vpack.c.b16 %v362, %v360
    %v407 = vpack.c.b16 %v363, %v361
    %v408 = vpack.c.b16 %v366, %v364
    %v409 = vpack.c.b16 %v367, %v365
    %v410 = vpack.c.b16 %v370, %v368
    %v411 = vpack.c.b16 %v371, %v369
    %v412 = vpack.c.b16 %v374, %v372
    %v413 = vpack.c.b16 %v375, %v373
    %v414 = vpack.c.b16 %v378, %v376
    %v415 = vpack.c.b16 %v379, %v377
    %v416 = vpack.c.b16 %v382, %v380
    %v417 = vpack.c.b16 %v383, %v381
    %v418 = vpack.c.b16 %v386, %v384
    %v419 = vpack.c.b16 %v387, %v385
    %452 = vmatprep.subr.bf16.mxu0 %v403
    %453 = vmatpush1.bf16.msra.mxu0 %v402
    %454 = vmatprep.subr.bf16.mxu0 %v401
    %455 = vmatpush1.bf16.msra.mxu0 %v400
    %456 = vmatprep.subr.bf16.mxu0 %v399
    %457 = vmatpush1.bf16.msra.mxu0 %v398
    %458 = vmatprep.subr.bf16.mxu0 %v397
    %459 = vmatpush1.bf16.msra.mxu0 %v396
    %460 = vmatprep.subr.bf16.mxu0 %v395
    %461 = vmatpush1.bf16.msra.mxu0 %v394
    %462 = vmatprep.subr.bf16.mxu0 %v393
    %463 = vmatpush1.bf16.msra.mxu0 %v392
    %464 = vmatprep.subr.bf16.mxu0 %v391
    %465 = vmatpush1.bf16.msra.mxu0 %v390
    %466 = vmatprep.subr.bf16.mxu0 %v389
    %467 = vmatpush1.bf16.msra.mxu0 %v388
    %468 = vmatprep.subr.bf16.mxu0 %v419
    %469 = vmatpush2.bf16.msra.mxu0 %v418
    %470 = vmatprep.subr.bf16.mxu0 %v417
    %471 = vmatpush2.bf16.msra.mxu0 %v416
    %472 = vmatprep.subr.bf16.mxu0 %v415
    %473 = vmatpush2.bf16.msra.mxu0 %v414
    %474 = vmatprep.subr.bf16.mxu0 %v413
    %475 = vmatpush2.bf16.msra.mxu0 %v412
    %476 = vmatprep.subr.bf16.mxu0 %v411
    %477 = vmatpush2.bf16.msra.mxu0 %v410
    %478 = vmatprep.subr.bf16.mxu0 %v409
    %479 = vmatpush2.bf16.msra.mxu0 %v408
    %480 = vmatprep.subr.bf16.mxu0 %v407
    %481 = vmatpush2.bf16.msra.mxu0 %v406
    %482 = vmatprep.subr.bf16.mxu0 %v405
    %483 = vmatpush2.bf16.msra.mxu0 %v404
    %484 = vmatprep.mubr.bf16.mxu0 %v247
    %485 = vmatmul.mubr.bf16.gmra.mxu0 %v246
    %v486 = vpop.f32.mrf.mxu0
    %v487 = vadd.f32 %v285, %v486
    %v488 = vpop.f32.mrf.mxu0
    %v489 = vadd.f32 %v289, %v488
    %v490 = vpop.f32.mrf.mxu0
    %v491 = vadd.f32 %v285, %v490
    %v492 = vpop.f32.mrf.mxu0
    %v493 = vadd.f32 %v289, %v492
    %494 = vdwg.mxu0
    %v495 = vmax.f32 %v487, 0.0
    %v496 = vmax.f32 %v489, 0.0
    %v497 = vmax.f32 %v491, 0.0
    %v498 = vmax.f32 %v493, 0.0
    %v499 = vpack.c.bf16 %v497, %v495
    %v500 = vpack.c.bf16 %v498, %v496
    %v501 = vld [vmem:[#allocation8] sm:$0xff]
    %v502 = vld [vmem:[#allocation8 + $0x8] sm:$0xff]
    %v503 = vld [vmem:[#allocation8 + $0x10] sm:$0xff]
    %v504 = vld [vmem:[#allocation8 + $0x18] sm:$0xff]
    %v505 = vld [vmem:[#allocation8 + $0x20] sm:$0xff]
    %v506 = vld [vmem:[#allocation8 + $0x28] sm:$0xff]
    %v507 = vld [vmem:[#allocation8 + $0x30] sm:$0xff]
    %v508 = vld [vmem:[#allocation8 + $0x38] sm:$0xff]
    %v509 = vld [vmem:[#allocation8 + $0x40] sm:$0xff]
    %v510 = vld [vmem:[#allocation8 + $0x48] sm:$0xff]
    %v511 = vld [vmem:[#allocation8 + $0x50] sm:$0xff]
    %v512 = vld [vmem:[#allocation8 + $0x58] sm:$0xff]
    %v513 = vld [vmem:[#allocation8 + $0x60] sm:$0xff]
    %v514 = vld [vmem:[#allocation8 + $0x68] sm:$0xff]
    %v515 = vld [vmem:[#allocation8 + $0x70] sm:$0xff]
    %v516 = vld [vmem:[#allocation8 + $0x78] sm:$0xff]
    %v517 = vld [vmem:[#allocation8 + $0x80] sm:$0xff]
    %v518 = vld [vmem:[#allocation8 + $0x88] sm:$0xff]
    %v519 = vld [vmem:[#allocation8 + $0x90] sm:$0xff]
    %v520 = vld [vmem:[#allocation8 + $0x98] sm:$0xff]
    %v521 = vld [vmem:[#allocation8 + $0xa0] sm:$0xff]
    %v522 = vld [vmem:[#allocation8 + $0xa8] sm:$0xff]
    %v523 = vld [vmem:[#allocation8 + $0xb0] sm:$0xff]
    %v524 = vld [vmem:[#allocation8 + $0xb8] sm:$0xff]
    %v525 = vld [vmem:[#allocation8 + $0xc0] sm:$0xff]
    %v526 = vld [vmem:[#allocation8 + $0xc8] sm:$0xff]
    %v527 = vld [vmem:[#allocation8 + $0xd0] sm:$0xff]
    %v528 = vld [vmem:[#allocation8 + $0xd8] sm:$0xff]
    %v529 = vld [vmem:[#allocation8 + $0xe0] sm:$0xff]
    %v530 = vld [vmem:[#allocation8 + $0xe8] sm:$0xff]
    %v531 = vld [vmem:[#allocation8 + $0xf0] sm:$0xff]
    %v532 = vld [vmem:[#allocation8 + $0xf8] sm:$0xff]
    %v533 = vld [vmem:[%s6] sm:$0x3]
    %v535 = vlaneseq
    %v536 = vshrl.u32 %v535, 7
    %v537 = vsub.s32 0, %v536
    %v538 = vrot.slane %v533, %v537
    %v539 = vlaneseq
    %v540 = vshrl.u32 %v539, 7
    %v541 = vsub.s32 1, %v540
    %v542 = vrot.slane %v533, %v541
    %v577 = vunpack.c.l.b16 %v501
    %v578 = vunpack.c.h.b16 %v501
    %v579 = vunpack.c.l.b16 %v502
    %v580 = vunpack.c.h.b16 %v502
    %v581 = vunpack.c.l.b16 %v503
    %v582 = vunpack.c.h.b16 %v503
    %v583 = vunpack.c.l.b16 %v504
    %v584 = vunpack.c.h.b16 %v504
    %v585 = vunpack.c.l.b16 %v505
    %v586 = vunpack.c.h.b16 %v505
    %v587 = vunpack.c.l.b16 %v506
    %v588 = vunpack.c.h.b16 %v506
    %v589 = vunpack.c.l.b16 %v507
    %v590 = vunpack.c.h.b16 %v507
    %v591 = vunpack.c.l.b16 %v508
    %v592 = vunpack.c.h.b16 %v508
    %v593 = vunpack.c.l.b16 %v509
    %v594 = vunpack.c.h.b16 %v509
    %v595 = vunpack.c.l.b16 %v510
    %v596 = vunpack.c.h.b16 %v510
    %v597 = vunpack.c.l.b16 %v511
    %v598 = vunpack.c.h.b16 %v511
    %v599 = vunpack.c.l.b16 %v512
    %v600 = vunpack.c.h.b16 %v512
    %v601 = vunpack.c.l.b16 %v513
    %v602 = vunpack.c.h.b16 %v513
    %v603 = vunpack.c.l.b16 %v514
    %v604 = vunpack.c.h.b16 %v514
    %v605 = vunpack.c.l.b16 %v515
    %v606 = vunpack.c.h.b16 %v515
    %v607 = vunpack.c.l.b16 %v516
    %v608 = vunpack.c.h.b16 %v516
    %v609 = vunpack.c.l.b16 %v517
    %v610 = vunpack.c.h.b16 %v517
    %v611 = vunpack.c.l.b16 %v518
    %v612 = vunpack.c.h.b16 %v518
    %v613 = vunpack.c.l.b16 %v519
    %v614 = vunpack.c.h.b16 %v519
    %v615 = vunpack.c.l.b16 %v520
    %v616 = vunpack.c.h.b16 %v520
    %v617 = vunpack.c.l.b16 %v521
    %v618 = vunpack.c.h.b16 %v521
    %v619 = vunpack.c.l.b16 %v522
    %v620 = vunpack.c.h.b16 %v522
    %v621 = vunpack.c.l.b16 %v523
    %v622 = vunpack.c.h.b16 %v523
    %v623 = vunpack.c.l.b16 %v524
    %v624 = vunpack.c.h.b16 %v524
    %v625 = vunpack.c.l.b16 %v525
    %v626 = vunpack.c.h.b16 %v525
    %v627 = vunpack.c.l.b16 %v526
    %v628 = vunpack.c.h.b16 %v526
    %v629 = vunpack.c.l.b16 %v527
    %v630 = vunpack.c.h.b16 %v527
    %v631 = vunpack.c.l.b16 %v528
    %v632 = vunpack.c.h.b16 %v528
    %v633 = vunpack.c.l.b16 %v529
    %v634 = vunpack.c.h.b16 %v529
    %v635 = vunpack.c.l.b16 %v530
    %v636 = vunpack.c.h.b16 %v530
    %v637 = vunpack.c.l.b16 %v531
    %v638 = vunpack.c.h.b16 %v531
    %v639 = vunpack.c.l.b16 %v532
    %v640 = vunpack.c.h.b16 %v532
    %v641 = vpack.c.b16 %v579, %v577
    %v642 = vpack.c.b16 %v580, %v578
    %v643 = vpack.c.b16 %v583, %v581
    %v644 = vpack.c.b16 %v584, %v582
    %v645 = vpack.c.b16 %v587, %v585
    %v646 = vpack.c.b16 %v588, %v586
    %v647 = vpack.c.b16 %v591, %v589
    %v648 = vpack.c.b16 %v592, %v590
    %v649 = vpack.c.b16 %v595, %v593
    %v650 = vpack.c.b16 %v596, %v594
    %v651 = vpack.c.b16 %v599, %v597
    %v652 = vpack.c.b16 %v600, %v598
    %v653 = vpack.c.b16 %v603, %v601
    %v654 = vpack.c.b16 %v604, %v602
    %v655 = vpack.c.b16 %v607, %v605
    %v656 = vpack.c.b16 %v608, %v606
    %v657 = vpack.c.b16 %v611, %v609
    %v658 = vpack.c.b16 %v612, %v610
    %v659 = vpack.c.b16 %v615, %v613
    %v660 = vpack.c.b16 %v616, %v614
    %v661 = vpack.c.b16 %v619, %v617
    %v662 = vpack.c.b16 %v620, %v618
    %v663 = vpack.c.b16 %v623, %v621
    %v664 = vpack.c.b16 %v624, %v622
    %v665 = vpack.c.b16 %v627, %v625
    %v666 = vpack.c.b16 %v628, %v626
    %v667 = vpack.c.b16 %v631, %v629
    %v668 = vpack.c.b16 %v632, %v630
    %v669 = vpack.c.b16 %v635, %v633
    %v670 = vpack.c.b16 %v636, %v634
    %v671 = vpack.c.b16 %v639, %v637
    %v672 = vpack.c.b16 %v640, %v638
    %705 = vmatprep.subr.bf16.mxu0 %v656
    %706 = vmatpush1.bf16.msra.mxu0 %v655
    %707 = vmatprep.subr.bf16.mxu0 %v654
    %708 = vmatpush1.bf16.msra.mxu0 %v653
    %709 = vmatprep.subr.bf16.mxu0 %v652
    %710 = vmatpush1.bf16.msra.mxu0 %v651
    %711 = vmatprep.subr.bf16.mxu0 %v650
    %712 = vmatpush1.bf16.msra.mxu0 %v649
    %713 = vmatprep.subr.bf16.mxu0 %v648
    %714 = vmatpush1.bf16.msra.mxu0 %v647
    %715 = vmatprep.subr.bf16.mxu0 %v646
    %716 = vmatpush1.bf16.msra.mxu0 %v645
    %717 = vmatprep.subr.bf16.mxu0 %v644
    %718 = vmatpush1.bf16.msra.mxu0 %v643
    %719 = vmatprep.subr.bf16.mxu0 %v642
    %720 = vmatpush1.bf16.msra.mxu0 %v641
    %721 = vmatprep.subr.bf16.mxu0 %v672
    %722 = vmatpush2.bf16.msra.mxu0 %v671
    %723 = vmatprep.subr.bf16.mxu0 %v670
    %724 = vmatpush2.bf16.msra.mxu0 %v669
    %725 = vmatprep.subr.bf16.mxu0 %v668
    %726 = vmatpush2.bf16.msra.mxu0 %v667
    %727 = vmatprep.subr.bf16.mxu0 %v666
    %728 = vmatpush2.bf16.msra.mxu0 %v665
    %729 = vmatprep.subr.bf16.mxu0 %v664
    %730 = vmatpush2.bf16.msra.mxu0 %v663
    %731 = vmatprep.subr.bf16.mxu0 %v662
    %732 = vmatpush2.bf16.msra.mxu0 %v661
    %733 = vmatprep.subr.bf16.mxu0 %v660
    %734 = vmatpush2.bf16.msra.mxu0 %v659
    %735 = vmatprep.subr.bf16.mxu0 %v658
    %736 = vmatpush2.bf16.msra.mxu0 %v657
    %737 = vmatprep.mubr.bf16.mxu0 %v500
    %738 = vmatmul.mubr.bf16.gmra.mxu0 %v499
    %v739 = vpop.f32.mrf.mxu0
    %v740 = vadd.f32 %v538, %v739
    %v741 = vpop.f32.mrf.mxu0
    %v742 = vadd.f32 %v542, %v741
    %v743 = vpop.f32.mrf.mxu0
    %v744 = vadd.f32 %v538, %v743
    %v745 = vpop.f32.mrf.mxu0
    %v746 = vadd.f32 %v542, %v745
    %747 = vdwg.mxu0
    %v748 = vmax.f32 %v740, 0.0
    %v749 = vmax.f32 %v742, 0.0
    %v750 = vmax.f32 %v744, 0.0
    %v751 = vmax.f32 %v746, 0.0
    %752 = vst [vmem:[#allocation10] sm:$0xff] %v748
    %753 = vst [vmem:[#allocation10 + $0x8] sm:$0xff] %v749
    %754 = vst [vmem:[#allocation10 + $0x10] sm:$0xff] %v750
    %755 = vst [vmem:[#allocation10 + $0x18] sm:$0xff] %v751
    // Predicated region
    $region46: #{tpu_custom_call.1} parent=1 // pred_check
      _
    $region47: #{tpu_custom_call.1} parent=1 // pred_check_branch
      %757 = sbr.rel (0) target = $region49
    $region48: #{tpu_custom_call.1} parent=1 // pred_region
      %s759 = ssub.s32 512, 512
      %760 = vsyncadd [#allocation4], %s759
      %s761 = sshll.u32 [#allocation10], 4
      %s762 = int_to_ptr.vmem [resolvable:$true] %s761
      %767 = dma.vmem_to_hbm [thread:$0]  %s762, 512, %s7, [#allocation4], 256, 256, 16
    $region49: #{tpu_custom_call.1} parent=1 // pred_fallthru
      _
    // Predicated region
    $region50: #{tpu_custom_call.1} parent=1 // pred_check
      _
    $region51: #{tpu_custom_call.1} parent=1 // pred_check_branch
      %769 = sbr.rel (0) target = $region53
    $region52: #{tpu_custom_call.1} parent=1 // pred_region
      %770 = dma.done [#allocation4], 512
    $region53: #{tpu_custom_call.1} parent=1 // pred_fallthru
      _
    %771 = vsyncpa [#allocation3], 1
    %772 = vsyncpa [#allocation6], 1
    %773 = vsyncpa [#allocation9], 1
    %774 = vsyncpa [#allocation4], 1

</llo_original>
